<compile_context>
chip_gen: v5e
topology: v5e:2x2
jax: 0.10.0
libtpu: 0.0.40
codegen_flags: <defaults>
</compile_context>

<pallas_src>
import jax
import jax.numpy as jnp
from jax.experimental import pallas as pl
from jax.experimental.pallas import tpu as pltpu


# ----------------------------------------------------------------------------
# Model configuration
# ----------------------------------------------------------------------------
INPUT_LEN = 16
PRED_LEN = 8
PATCH = 4
D_MODEL = 8
ENC_NUM = 2          # encoder_layer
EPS = 1e-5


# ----------------------------------------------------------------------------
# Fused Pallas kernel (one grid step per batch element)
# ----------------------------------------------------------------------------
def _make_hst_kernel(enc_num, seq_len, pred_len, eps):
    L, P = seq_len, pred_len

    def kernel(x_ref, w_ref, b_ref, o_ref):
        # x_ref : (L, V)  one batch element, time on sublanes, vars on lanes.
        # w_ref : (enc_num*L + enc_num*P, L) packed, pre-transposed, pre-folded
        #         weights (W_A0^T | W_A1^T | ... | H_0^T | H_1^T | ...).
        # b_ref : (L, enc_num + 1) packed folded biases as columns.
        # o_ref : (P, V)
        x = x_ref[...]

        # --- RevIN 'stats' + 'norm' (sublane reduction over the time axis) ---
        mean = jnp.mean(x, axis=0, keepdims=True)            # (1, V)
        dev = x - mean
        var = jnp.mean(dev * dev, axis=0, keepdims=True)
        std = jnp.sqrt(var + eps)                            # (1, V)
        inv_std = pl.reciprocal(std)                         # exact reciprocal
        cur = dev * inv_std                                  # (L, V)

        # --- Encoder levels + head (Encoder_Cross == identity), unrolled -----
        head = None
        for i in range(enc_num):
            # Folded (embed -> linear1[0]) / (linear2 -> linear3 -> linear1[i]).
            w_i = w_ref[i * L:(i + 1) * L, :]                # (L, L)
            c_i = b_ref[:, i:i + 1]                          # (L, 1)
            x_cur = jnp.dot(w_i, cur,
                            preferred_element_type=jnp.float32) + c_i
            # Folded head contribution of this level (wfa_i -> wfb).
            h_i = w_ref[enc_num * L + i * P: enc_num * L + (i + 1) * P, :]
            contrib = jnp.dot(h_i, x_cur,
                              preferred_element_type=jnp.float32)  # (P, V)
            head = contrib if head is None else head + contrib
            if i != enc_num - 1:
                # RevIN 'norm' of x_current with the stored stats.
                cur = (x_cur - mean) * inv_std

        out = head + b_ref[0:P, enc_num:enc_num + 1]         # (P, V) + (P, 1)

        # --- RevIN 'denorm' ---------------------------------------------------
        o_ref[...] = (out * std + mean).astype(o_ref.dtype)

    return kernel


# ----------------------------------------------------------------------------
# One-time parameter packing (hoisted out of the forward / jit path)
# ----------------------------------------------------------------------------
def pack_params(params):
    """Fold the bias-free linear chains and pack everything into 2 buffers."""
    f32 = jnp.float32
    L, pred = INPUT_LEN, PRED_LEN
    p0 = L // PATCH

    def bd(w, n):            # n copies of w (in,out) on the block diagonal
        return jnp.kron(jnp.eye(n, dtype=f32), w.astype(f32))

    def tb(b, n):            # tiled bias vector
        return jnp.tile(b.astype(f32), n)

    # Level 0: DataEmbedding -> linear1[0]  (no nonlinearity between them).
    A = bd(params["embed_w"], p0)            # (L, p0*D)
    a = tb(params["embed_b"], p0)            # (p0*D,)
    B1 = bd(params["w1"][0], p0)             # (p0*D, L)
    b1 = tb(params["b1"][0], p0)             # (L,)
    W_list = [A @ B1]                        # (L, L)
    c_list = [a @ B1 + b1]                   # (L,)

    # Levels i >= 1: linear2[i-1] -> linear3[i-1] -> linear1[i].
    for i in range(1, ENC_NUM):
        p_prev = p0 // (2 ** (i - 1))
        p_cur = p_prev // 2
        C = bd(params["w2"][i - 1], p_prev)  # (L, p_prev*D)
        c = tb(params["b2"][i - 1], p_prev)
        Dm = bd(params["w3"][i - 1], p_cur)  # (p_prev*D, p_cur*D)
        d = tb(params["b3"][i - 1], p_cur)
        E = bd(params["w1"][i], p_cur)       # (p_cur*D, L)
        e = tb(params["b1"][i], p_cur)
        W_list.append(C @ Dm @ E)            # (L, L)
        c_list.append((c @ Dm + d) @ E + e)  # (L,)

    # Head: per-level wfa_i -> wfb fold, plus combined bias.
    wfa = params["wfa"].astype(f32)
    wfb = params["wfb"].astype(f32)
    H_list = [wfa[i * L:(i + 1) * L, :] @ wfb for i in range(ENC_NUM)]  # (L, pred)
    c_head = params["bfa"].astype(f32) @ wfb + params["bfb"].astype(f32)  # (pred,)

    # Weight buffer: all matrices pre-transposed for the (L, V) column layout,
    # stacked along sublanes: (ENC_NUM*L + ENC_NUM*pred, L).
    w_pack = jnp.concatenate([W.T for W in W_list] + [H.T for H in H_list],
                             axis=0).astype(f32)

    # Bias buffer: folded biases as columns, head bias zero-padded to L rows.
    ch = jnp.zeros((L,), f32).at[:pred].set(c_head)
    b_pack = jnp.stack([*c_list, ch], axis=1).astype(f32)    # (L, ENC_NUM+1)
    return w_pack, b_pack


# ----------------------------------------------------------------------------
# HST forward (single pallas_call, grid over batch, no wrapper transposes)
# ----------------------------------------------------------------------------
def hst_forward(packed, x, var_ccc):
    """x: (B, L, V), var_ccc: (B, ENC_NUM, V) (unused - Encoder_Cross identity)."""
    del var_ccc  # TODO(synk): Encoder_Cross (self/cross attention) not provided.
    w_pack, b_pack = packed
    B, L, V = x.shape

    return pl.pallas_call(
        _make_hst_kernel(ENC_NUM, L, PRED_LEN, EPS),
        out_shape=jax.ShapeDtypeStruct((B, PRED_LEN, V), x.dtype),
        grid=(B,),
        in_specs=[
            pl.BlockSpec((None, L, V), lambda b: (b, 0, 0)),
            pl.BlockSpec(w_pack.shape, lambda b: (0, 0)),   # resident weights
            pl.BlockSpec(b_pack.shape, lambda b: (0, 0)),   # resident biases
        ],
        out_specs=pl.BlockSpec((None, PRED_LEN, V), lambda b: (b, 0, 0)),
        compiler_params=pltpu.CompilerParams(
            dimension_semantics=("parallel",)),
    )(x, w_pack, b_pack)


# ----------------------------------------------------------------------------
# Pure-JAX reference (unfused, mirrors the PyTorch control flow, raw params)
# ----------------------------------------------------------------------------
def hst_forward_ref(params, x, var_ccc):
    del var_ccc
    B, L, V = x.shape
    mean = jnp.mean(x, axis=1, keepdims=True)
    std = jnp.sqrt(jnp.var(x, axis=1, keepdims=True) + EPS)
    xn = (x - mean) / std

    x4 = xn.reshape(B, L // PATCH, PATCH, V).transpose(0, 3, 1, 2)   # (B,V,P0,patch)
    x_enc = x4 @ params["embed_w"] + params["embed_b"]               # (B,V,P0,D)

    enc_list = []
    for i in range(ENC_NUM):
        _, _, P, D = x_enc.shape
        x_cur = (x_enc @ params["w1"][i] + params["b1"][i]).reshape(B, V, -1)
        enc_list.append(x_cur)
        if i != ENC_NUM - 1:
            x_cn = (x_cur.transpose(0, 2, 1) - mean) / std
            x_cn = x_cn.transpose(0, 2, 1)
            x_enc = x_cn.reshape(B, V, P, -1) @ params["w2"][i] + params["b2"][i]
            x_enc = x_enc.reshape(B, V, P // 2, 2 * D)
            x_enc = x_enc @ params["w3"][i] + params["b3"][i]

    enc_map = jnp.concatenate(enc_list, axis=-1)                     # (B,V,L*ENC_NUM)
    h = enc_map @ params["wfa"] + params["bfa"]
    h = h @ params["wfb"] + params["bfb"]
    out = h.transpose(0, 2, 1)                                       # (B,pred,V)
    return out * std + mean


# ----------------------------------------------------------------------------
# Deterministic parameter init
# ----------------------------------------------------------------------------
def init_params(key):
    def dense(k, fan_in, fan_out):
        k1, k2 = jax.random.split(k)
        w = jax.random.normal(k1, (fan_in, fan_out), jnp.float32) * 0.02
        b = jax.random.normal(k2, (fan_out,), jnp.float32) * 0.02
        return w, b

    keys = jax.random.split(key, 3 + 3 * ENC_NUM + 2)
    ki = iter(keys)

    params = {}
    params["embed_w"], params["embed_b"] = dense(next(ki), PATCH, D_MODEL)

    params["w1"], params["b1"] = [], []
    for i in range(ENC_NUM):
        w, b = dense(next(ki), D_MODEL, PATCH * 2 ** i)
        params["w1"].append(w)
        params["b1"].append(b)

    params["w2"], params["b2"] = [], []
    for i in range(ENC_NUM - 1):
        w, b = dense(next(ki), PATCH * 2 ** i, D_MODEL)
        params["w2"].append(w)
        params["b2"].append(b)

    params["w3"], params["b3"] = [], []
    for i in range(ENC_NUM - 1):
        w, b = dense(next(ki), 2 * D_MODEL, D_MODEL)
        params["w3"].append(w)
        params["b3"].append(b)

    params["wfa"], params["bfa"] = dense(next(ki), INPUT_LEN * ENC_NUM, 2 * PRED_LEN)
    params["wfb"], params["bfb"] = dense(next(ki), 2 * PRED_LEN, PRED_LEN)
    return params


# ----------------------------------------------------------------------------
if __name__ == "__main__":
    B, V = 2, 4
    key = jax.random.PRNGKey(0)
    kx, kv, kp = jax.random.split(key, 3)

    x = jax.random.normal(kx, (B, INPUT_LEN, V), jnp.float32)
    var_ccc = jax.random.normal(kv, (B, ENC_NUM, V), jnp.float32)
    params = init_params(kp)

    # One-time packing (hoisted out of the jitted forward path).
    packed = pack_params(params)

    fwd = jax.jit(hst_forward)
    out = jax.block_until_ready(fwd(packed, x, var_ccc))

    assert out.shape == (B, PRED_LEN, V), out.shape
    assert bool(jnp.all(jnp.isfinite(out)))

    ref = hst_forward_ref(params, x, var_ccc)
    max_err = float(jnp.max(jnp.abs(out - ref)))
    assert jnp.allclose(out, ref, atol=5e-3, rtol=5e-3), max_err

    print("KERNEL_OK")
</pallas_src>

<mosaic_0001>
module attributes {stable_mosaic.version = 11 : i64} {
  func.func @kernel(%arg0: i32, %arg1: memref<1x16x4xf32, #tpu.memory_space<vmem>>, %arg2: memref<48x16xf32, #tpu.memory_space<vmem>>, %arg3: memref<16x3xf32, #tpu.memory_space<vmem>>, %arg4: memref<1x8x4xf32, #tpu.memory_space<vmem>>) attributes {dimension_semantics = [#tpu.dimension_semantics<parallel>], iteration_bounds = array<i64: 2>, scalar_prefetch = 0 : i64, scratch_operands = 0 : i64, tpu.core_type = #tpu.core_type<tc>, window_params = [{transform_indices = @transform_0, window_bounds = array<i64: 1, 16, 4>}, {pipeline_mode = #tpu.pipeline_mode<synchronous>, transform_indices = @transform_1, window_bounds = array<i64: 48, 16>}, {pipeline_mode = #tpu.pipeline_mode<synchronous>, transform_indices = @transform_2, window_bounds = array<i64: 16, 3>}, {transform_indices = @transform_3, window_bounds = array<i64: 1, 8, 4>}]} {
    %c0 = arith.constant 0 : index
    %c0_0 = arith.constant 0 : index
    %c0_1 = arith.constant 0 : index
    %0 = vector.load %arg1[%c0, %c0_0, %c0_1] : memref<1x16x4xf32, #tpu.memory_space<vmem>>, vector<1x16x4xf32>
    %1 = vector.shape_cast %0 : vector<1x16x4xf32> to vector<16x4xf32>
    %cst = arith.constant dense<0.000000e+00> : vector<4xf32>
    %2 = vector.multi_reduction <add>, %1, %cst [0] : vector<16x4xf32> to vector<4xf32>
    %3 = vector.shape_cast %2 : vector<4xf32> to vector<1x4xf32>
    %cst_2 = arith.constant 1.600000e+01 : f32
    %4 = vector.broadcast %cst_2 : f32 to vector<1x4xf32>
    %5 = arith.divf %3, %4 : vector<1x4xf32>
    %6 = vector.broadcast %5 : vector<1x4xf32> to vector<16x4xf32>
    %7 = arith.subf %1, %6 : vector<16x4xf32>
    %8 = arith.mulf %7, %7 : vector<16x4xf32>
    %cst_3 = arith.constant dense<0.000000e+00> : vector<4xf32>
    %9 = vector.multi_reduction <add>, %8, %cst_3 [0] : vector<16x4xf32> to vector<4xf32>
    %10 = vector.shape_cast %9 : vector<4xf32> to vector<1x4xf32>
    %cst_4 = arith.constant 1.600000e+01 : f32
    %11 = vector.broadcast %cst_4 : f32 to vector<1x4xf32>
    %12 = arith.divf %10, %11 : vector<1x4xf32>
    %cst_5 = arith.constant 9.99999974E-6 : f32
    %13 = vector.broadcast %cst_5 : f32 to vector<1x4xf32>
    %14 = arith.addf %12, %13 : vector<1x4xf32>
    %15 = math.sqrt %14 : vector<1x4xf32>
    %16 = tpu.reciprocal %15 : vector<1x4xf32> -> vector<1x4xf32>
    %17 = vector.broadcast %16 : vector<1x4xf32> to vector<16x4xf32>
    %18 = arith.mulf %7, %17 : vector<16x4xf32>
    %c0_6 = arith.constant 0 : index
    %c0_7 = arith.constant 0 : index
    %19 = vector.load %arg2[%c0_6, %c0_7] : memref<48x16xf32, #tpu.memory_space<vmem>>, vector<16x16xf32>
    %c0_8 = arith.constant 0 : index
    %c0_9 = arith.constant 0 : index
    %20 = vector.load %arg3[%c0_8, %c0_9] : memref<16x3xf32, #tpu.memory_space<vmem>>, vector<16x1xf32>
    %cst_10 = arith.constant dense<0.000000e+00> : vector<16x4xf32>
    %21 = tpu.matmul %19, %18, %cst_10 {dimension_numbers = #tpu.dot_dimension_numbers<[1], [0], [0], [1], [0, 0, 1, 1], [], []>} : vector<16x16xf32>, vector<16x4xf32>, vector<16x4xf32> -> vector<16x4xf32>
    %22 = vector.broadcast %20 : vector<16x1xf32> to vector<16x4xf32>
    %23 = arith.addf %21, %22 : vector<16x4xf32>
    %c32 = arith.constant 32 : index
    %c0_11 = arith.constant 0 : index
    %24 = vector.load %arg2[%c32, %c0_11] : memref<48x16xf32, #tpu.memory_space<vmem>>, vector<8x16xf32>
    %cst_12 = arith.constant dense<0.000000e+00> : vector<8x4xf32>
    %25 = tpu.matmul %24, %23, %cst_12 {dimension_numbers = #tpu.dot_dimension_numbers<[1], [0], [0], [1], [0, 0, 1, 1], [], []>} : vector<8x16xf32>, vector<16x4xf32>, vector<8x4xf32> -> vector<8x4xf32>
    %26 = vector.broadcast %5 : vector<1x4xf32> to vector<16x4xf32>
    %27 = arith.subf %23, %26 : vector<16x4xf32>
    %28 = vector.broadcast %16 : vector<1x4xf32> to vector<16x4xf32>
    %29 = arith.mulf %27, %28 : vector<16x4xf32>
    %c16 = arith.constant 16 : index
    %c0_13 = arith.constant 0 : index
    %30 = vector.load %arg2[%c16, %c0_13] : memref<48x16xf32, #tpu.memory_space<vmem>>, vector<16x16xf32>
    %c0_14 = arith.constant 0 : index
    %c1 = arith.constant 1 : index
    %31 = vector.load %arg3[%c0_14, %c1] : memref<16x3xf32, #tpu.memory_space<vmem>>, vector<16x1xf32>
    %cst_15 = arith.constant dense<0.000000e+00> : vector<16x4xf32>
    %32 = tpu.matmul %30, %29, %cst_15 {dimension_numbers = #tpu.dot_dimension_numbers<[1], [0], [0], [1], [0, 0, 1, 1], [], []>} : vector<16x16xf32>, vector<16x4xf32>, vector<16x4xf32> -> vector<16x4xf32>
    %33 = vector.broadcast %31 : vector<16x1xf32> to vector<16x4xf32>
    %34 = arith.addf %32, %33 : vector<16x4xf32>
    %c40 = arith.constant 40 : index
    %c0_16 = arith.constant 0 : index
    %35 = vector.load %arg2[%c40, %c0_16] : memref<48x16xf32, #tpu.memory_space<vmem>>, vector<8x16xf32>
    %cst_17 = arith.constant dense<0.000000e+00> : vector<8x4xf32>
    %36 = tpu.matmul %35, %34, %cst_17 {dimension_numbers = #tpu.dot_dimension_numbers<[1], [0], [0], [1], [0, 0, 1, 1], [], []>} : vector<8x16xf32>, vector<16x4xf32>, vector<8x4xf32> -> vector<8x4xf32>
    %37 = arith.addf %25, %36 : vector<8x4xf32>
    %c0_18 = arith.constant 0 : index
    %c2 = arith.constant 2 : index
    %38 = vector.load %arg3[%c0_18, %c2] : memref<16x3xf32, #tpu.memory_space<vmem>>, vector<8x1xf32>
    %39 = vector.broadcast %38 : vector<8x1xf32> to vector<8x4xf32>
    %40 = arith.addf %37, %39 : vector<8x4xf32>
    %41 = vector.broadcast %15 : vector<1x4xf32> to vector<8x4xf32>
    %42 = arith.mulf %40, %41 : vector<8x4xf32>
    %43 = vector.broadcast %5 : vector<1x4xf32> to vector<8x4xf32>
    %44 = arith.addf %42, %43 : vector<8x4xf32>
    %c0_19 = arith.constant 0 : index
    %c0_20 = arith.constant 0 : index
    %c0_21 = arith.constant 0 : index
    %45 = vector.load %arg4[%c0_19, %c0_20, %c0_21] : memref<1x8x4xf32, #tpu.memory_space<vmem>>, vector<1x8x4xf32>
    %46 = vector.shape_cast %45 : vector<1x8x4xf32> to vector<8x4xf32>
    %47 = vector.shape_cast %44 : vector<8x4xf32> to vector<1x8x4xf32>
    tpu.vector_store %arg4[%c0_19, %c0_20, %c0_21], %47 {strides = array<i32>} : memref<1x8x4xf32, #tpu.memory_space<vmem>>, vector<1x8x4xf32>,
    return
  }
  func.func @transform_0(%arg0: i32) -> (i32, i32, i32) {
    %c0_i32 = arith.constant 0 : i32
    %c0_i32_0 = arith.constant 0 : i32
    %c0_i32_1 = arith.constant 0 : i32
    return %arg0, %c0_i32, %c0_i32_0 : i32, i32, i32
  }
  func.func @transform_1(%arg0: i32) -> (i32, i32) {
    %c0_i32 = arith.constant 0 : i32
    %c0_i32_0 = arith.constant 0 : i32
    %c0_i32_1 = arith.constant 0 : i32
    return %c0_i32, %c0_i32_0 : i32, i32
  }
  func.func @transform_2(%arg0: i32) -> (i32, i32) {
    %c0_i32 = arith.constant 0 : i32
    %c0_i32_0 = arith.constant 0 : i32
    %c0_i32_1 = arith.constant 0 : i32
    return %c0_i32, %c0_i32_0 : i32, i32
  }
  func.func @transform_3(%arg0: i32) -> (i32, i32, i32) {
    %c0_i32 = arith.constant 0 : i32
    %c0_i32_0 = arith.constant 0 : i32
    %c0_i32_1 = arith.constant 0 : i32
    return %arg0, %c0_i32, %c0_i32_0 : i32, i32, i32
  }
}

</mosaic_0001>

<llo_original>
// kernel: hst_forward.1
$region0: #{hst_forward.1}
  #allocation0 [shape = 'u32[]', space=smem, size = 0x4, offset = 0x4, fixed_abs, tag = 'smem constant byte address 0x4 - core index']
  #allocation1 [shape = 'u32[72,128]{1,0:T(1,128)}', space=vmem, size = 0x9000, scoped, tag = 'internal scratch']
  %s0 = inlined_call_operand.vmem [shape: f32[2,16,4], index: 0, kind: input, shape index: {}]
  %s1 = inlined_call_operand.vmem [shape: f32[48,16], index: 1, kind: input, shape index: {}]
  %s2 = inlined_call_operand.vmem [shape: f32[16,3], index: 2, kind: input, shape index: {}]
  %s3 = inlined_call_operand.vmem [shape: f32[2,8,4], index: 3, kind: output, shape index: {}]
  %s4 = sld [smem:[#allocation0]]
  $region45: #{hst_forward.1} parent=0
    _
  %s6 = ssub.s32 1, %s4
  %s7 = scalar_select 0, %s6, %s4
  loop: start=0, step=1, limit=4
  $region2: #{hst_forward.1} parent=0 // loop_pre_header
    _
  $region3: #{hst_forward.1} parent=0 // loop_header
    %s9 = sphi 0, %s13
    %p10 = scmp.ge.s32.totalorder %s9, 4
    %s19 = sphi 0, %s21
    %s22 = sphi 0, %s19
    %s23 = sphi 0, %s22
    %s39 = sphi 0, %s23
    %s43 = sphi 0, %s43
    %s45 = sphi 0, %s43
    %s46 = sphi 0, %s45
    %s60 = sphi 0, %s46
    %s64 = sphi 0, %s64
    %s66 = sphi 0, %s64
    %s67 = sphi 0, %s66
    %s81 = sphi 0, %s67
    %s87 = sphi 0, %s89
    %s90 = sphi 0, %s87
    %s91 = sphi 0, %s90
    %s107 = sphi 0, %s91
  $region4: #{hst_forward.1} parent=0 // loop_header_branch
    %12 = sbr.rel (%p10) target = $region8
  $region5: #{hst_forward.1} parent=0 // loop_body
    %s14 = ssub.s32 %s9, 1
    %s15 = ssub.s32 %s9, 2
    %s16 = sadd.s32 %s9, 1
    %s17 = ssub.s32 %s9, %s16
    %p18 = scmp.eq.s32.totalorder %s17, 0
    %s20 = sadd.s32 %s19, 1
    %s21 = scalar_select %p18, %s19, %s20
    %p24 = pneg %p18
    %p25 = scmp.eq.s32.totalorder %s9, 1
    %p26 = por %p24, %p25
    %p27 = scmp.ne.s32.totalorder %s19, %s22
    %p28 = scmp.eq.s32.totalorder %s9, 0
    %p29 = por %p27, %p28
    %p30 = scmp.ne.s32.totalorder %s19, %s22
    %p31 = scmp.eq.s32.totalorder %s14, 1
    %p32 = por %p30, %p31
    %p33 = scmp.ne.s32.totalorder %s22, %s23
    %p34 = scmp.eq.s32.totalorder %s14, 0
    %p35 = por %p33, %p34
    %p36 = scmp.ne.s32.totalorder %s22, %s23
    %p37 = scmp.eq.s32.totalorder %s15, 1
    %p38 = por %p36, %p37
    %p40 = scmp.ne.s32.totalorder %s23, %s39
    %p41 = scmp.eq.s32.totalorder %s15, 0
    %p42 = por %p40, %p41
    %s44 = sadd.s32 %s43, 1
    %p47 = scmp.eq.s32.totalorder %s9, 1
    %p48 = scmp.ne.s32.totalorder %s43, %s45
    %p49 = scmp.eq.s32.totalorder %s9, 0
    %p50 = por %p48, %p49
    %p51 = scmp.ne.s32.totalorder %s43, %s45
    %p52 = scmp.eq.s32.totalorder %s14, 1
    %p53 = por %p51, %p52
    %p54 = scmp.ne.s32.totalorder %s45, %s46
    %p55 = scmp.eq.s32.totalorder %s14, 0
    %p56 = por %p54, %p55
    %p57 = scmp.ne.s32.totalorder %s45, %s46
    %p58 = scmp.eq.s32.totalorder %s15, 1
    %p59 = por %p57, %p58
    %p61 = scmp.ne.s32.totalorder %s46, %s60
    %p62 = scmp.eq.s32.totalorder %s15, 0
    %p63 = por %p61, %p62
    %s65 = sadd.s32 %s64, 1
    %p68 = scmp.eq.s32.totalorder %s9, 1
    %p69 = scmp.ne.s32.totalorder %s64, %s66
    %p70 = scmp.eq.s32.totalorder %s9, 0
    %p71 = por %p69, %p70
    %p72 = scmp.ne.s32.totalorder %s64, %s66
    %p73 = scmp.eq.s32.totalorder %s14, 1
    %p74 = por %p72, %p73
    %p75 = scmp.ne.s32.totalorder %s66, %s67
    %p76 = scmp.eq.s32.totalorder %s14, 0
    %p77 = por %p75, %p76
    %p78 = scmp.ne.s32.totalorder %s66, %s67
    %p79 = scmp.eq.s32.totalorder %s15, 1
    %p80 = por %p78, %p79
    %p82 = scmp.ne.s32.totalorder %s67, %s81
    %p83 = scmp.eq.s32.totalorder %s15, 0
    %p84 = por %p82, %p83
    %s85 = ssub.s32 %s9, %s16
    %p86 = scmp.eq.s32.totalorder %s85, 0
    %s88 = sadd.s32 %s87, 1
    %s89 = scalar_select %p86, %s87, %s88
    %p92 = pneg %p86
    %p93 = scmp.eq.s32.totalorder %s9, 1
    %p94 = por %p92, %p93
    %p95 = scmp.ne.s32.totalorder %s87, %s90
    %p96 = scmp.eq.s32.totalorder %s9, 0
    %p97 = por %p95, %p96
    %p98 = scmp.ne.s32.totalorder %s87, %s90
    %p99 = scmp.eq.s32.totalorder %s14, 1
    %p100 = por %p98, %p99
    %p101 = scmp.ne.s32.totalorder %s90, %s91
    %p102 = scmp.eq.s32.totalorder %s14, 0
    %p103 = por %p101, %p102
    %p104 = scmp.ne.s32.totalorder %s90, %s91
    %p105 = scmp.eq.s32.totalorder %s15, 1
    %p106 = por %p104, %p105
    %p108 = scmp.ne.s32.totalorder %s91, %s107
    %p109 = scmp.eq.s32.totalorder %s15, 0
    %p110 = por %p108, %p109
    %p111 = scmp.le.s32.totalorder 1, %s9
    %p112 = scmp.lt.s32.totalorder %s9, 3
    %p113 = pnand %p111, %p112
    %p114 = pneg %p113
    // Predicated region
    $region9: #{hst_forward.1} parent=5 // pred_check
      _
    $region10: #{hst_forward.1} parent=5 // pred_check_branch
      %116 = sbr.rel (%p113) target = $region12
    $region11: #{hst_forward.1} parent=5 // pred_region
      %s117 = ssub.s32 %s9, 1
      // Predicated region
      $region13: #{hst_forward.1} parent=11 // pred_check
        %p118 = pneg %p56
      $region14: #{hst_forward.1} parent=11 // pred_check_branch
        %120 = sbr.rel (%p118) target = $region16
      $region15: #{hst_forward.1} parent=11 // pred_region
        _
      $region16: #{hst_forward.1} parent=11 // pred_fallthru
        _
      // Predicated region
      $region17: #{hst_forward.1} parent=11 // pred_check
        %p121 = pneg %p77
      $region18: #{hst_forward.1} parent=11 // pred_check_branch
        %123 = sbr.rel (%p121) target = $region20
      $region19: #{hst_forward.1} parent=11 // pred_region
        _
      $region20: #{hst_forward.1} parent=11 // pred_fallthru
        _
    $region12: #{hst_forward.1} parent=5 // pred_fallthru
      _
    %p124 = scmp.lt.s32.totalorder %s9, 2
    // Predicated region
    $region21: #{hst_forward.1} parent=5 // pred_check
      %p125 = pneg %p124
    $region22: #{hst_forward.1} parent=5 // pred_check_branch
      %127 = sbr.rel (%p125) target = $region24
    $region23: #{hst_forward.1} parent=5 // pred_region
      // Predicated region
      $region25: #{hst_forward.1} parent=23 // pred_check
        %p128 = pneg %p29
      $region26: #{hst_forward.1} parent=23 // pred_check_branch
        %130 = sbr.rel (%p128) target = $region28
      $region27: #{hst_forward.1} parent=23 // pred_region
        %p131 = scmp.lt.s32.totalorder %s9, 1
        %s132 = scalar_select %p131, %s9, 1
        %s133 = smul.addr %s132, 2
        %s134 = smul.addr %s133, 8
        %s135 = scalar_lea.vmem %s0, %s134
      $region28: #{hst_forward.1} parent=23 // pred_fallthru
        _
    $region24: #{hst_forward.1} parent=5 // pred_fallthru
      _
    %p136 = scmp.le.s32.totalorder 1, %s9
    %p137 = scmp.lt.s32.totalorder %s9, 3
    %p138 = pnand %p136, %p137
    %p139 = pneg %p138
    // Predicated region
    $region29: #{hst_forward.1} parent=5 // pred_check
      _
    $region30: #{hst_forward.1} parent=5 // pred_check_branch
      %141 = sbr.rel (%p138) target = $region32
    $region31: #{hst_forward.1} parent=5 // pred_region
      %s142 = ssub.s32 %s9, 1
      %p143 = scmp.lt.s32.totalorder %s14, 1
      %s144 = scalar_select %p143, %s14, 1
      %s145 = smul.addr %s144, 2
      %s146 = smul.addr %s145, 8
      %s147 = scalar_lea.vmem %s0, %s146
      %p148 = pneg %p35
      %p149 = pneg %p32
      %p150 = pneg %p56
      %p151 = pneg %p53
      %p152 = pneg %p77
      %p153 = pneg %p74
      %p154 = pneg %p103
      %p155 = pneg %p100
      %p156 = scmp.lt.s32.totalorder %s14, 1
      %s157 = scalar_select %p156, %s14, 1
      %s158 = smul.addr %s157, 8
      %s159 = scalar_lea.vmem %s3, %s158
      %p160 = scmp.lt.s32.totalorder %s14, 1
      %s161 = scalar_select %p160, %s14, 1
      %s162 = smul.addr %s161, 2
      %s163 = smul.addr %s162, 8
      %s164 = scalar_lea.vmem %s0, %s163
      %p165 = scmp.lt.s32.totalorder %s14, 1
      %s166 = scalar_select %p165, %s14, 1
      %s167 = smul.addr %s166, 8
      %s168 = scalar_lea.vmem %s3, %s167
      %v169 = vld [vmem:[%s164] sm:$0xff]
      %v170 = vld [vmem:[%s164 + $0x8] sm:$0xff]
      %vm171 = vcmask 31744
      %v172 = vsel %vm171, %v169, 0.0
      %v173 = vsel %vm171, %v170, 0.0
      %v174 = vadd.f32 %v172, %v173
      %v175 = vrot.slane %v174, 4
      %v176 = vadd.f32 %v174, %v175
      %v177 = vrot.slane %v176, 2
      %v178 = vadd.f32 %v176, %v177
      %v179 = vrot.slane %v178, 1
      %v180 = vadd.f32 %v178, %v179
      %v181 = vrcp.pop 16.0
      %v182 = vmul.f32 16.0, %v181
      %v183 = vsub.f32 1.0, %v182
      %v184 = vmul.f32 %v181, %v183
      %v185 = vadd.f32 %v181, %v184
      %vm186 = vweird.f32 %v181
      %v187 = vsel %vm186, %v181, %v185
      %v188 = vmul.f32 %v180, %v187
      %v189 = vsub.f32 %v169, %v188
      %v190 = vsub.f32 %v170, %v188
      %v191 = vmul.f32 %v189, %v189
      %v192 = vmul.f32 %v190, %v190
      %v193 = vsel %vm171, %v191, 0.0
      %v194 = vsel %vm171, %v192, 0.0
      %v195 = vadd.f32 %v193, %v194
      %v196 = vrot.slane %v195, 4
      %v197 = vadd.f32 %v195, %v196
      %v198 = vrot.slane %v197, 2
      %v199 = vadd.f32 %v197, %v198
      %v200 = vrot.slane %v199, 1
      %v201 = vadd.f32 %v199, %v200
      %v202 = vmul.f32 %v201, %v187
      %v203 = vadd.f32 %v202, 1e-05
      %v204 = vrsqrt.pop %v203
      %v205 = vmul.f32 %v204, %v203
      %v206 = vmul.f32 %v205, %v204
      %v207 = vmul.f32 0.5, %v206
      %v208 = vsub.f32 1.5, %v207
      %v209 = vmul.f32 %v204, %v208
      %v210 = vmul.f32 %v203, %v209
      %vm211 = vcmp.eq.f32.partialorder %v203, inf
      %v212 = vsel %vm211, %v203, %v210
      %vm213 = vcmp.eq.f32.partialorder %v203, 0.0
      %v214 = vand.u32 %v203, 2147483648
      %v215 = vsel %vm213, %v214, %v212
      %v216 = vrcp.pop %v215
      %v217 = vmul.f32 %v215, %v216
      %v218 = vsub.f32 1.0, %v217
      %v219 = vmul.f32 %v216, %v218
      %v220 = vadd.f32 %v216, %v219
      %vm221 = vweird.f32 %v215
      %vm222 = vweird.f32 %v216
      %vm223 = vmor %vm221, %vm222
      %v224 = vsel %vm223, %v216, %v220
      %v225 = vand.u32 2147483647, %v215
      %vm226 = vcmp.eq.f32.partialorder %v225, 8.507059e+37
      %v227 = vand.u32 %v215, 2147483648
      %v228 = vor.u32 1.1754944e-38, %v227
      %v229 = vsel %vm226, %v228, %v224
      %v230 = vmul.f32 %v189, %v229
      %v231 = vmul.f32 %v190, %v229
      %v232 = vld [vmem:[%s1] sm:$0xff]
      %v233 = vld [vmem:[%s1 + $0x8] sm:$0xff]
      %v234 = vld [vmem:[%s2] sm:$0xff]
      %v235 = vld [vmem:[%s2 + $0x8] sm:$0xff]
      %237 = vset.pattern.permute.xlu0 0
      %238 = vperm.xlu0 %237, %v234
      %v239 = vpop.permute.xlu0 %238
      %242 = vset.pattern.permute.xlu0 0
      %243 = vperm.xlu0 %242, %v235
      %v244 = vpop.permute.xlu0 %243
      %vm246 = vcmask 130048
      %v248 = vsel %vm246, %v232, 0
      %v251 = vsel %vm246, %v233, 0
      %253 = vmatpush.msra.mxu0 0.0
      %254 = vmatpush.msra.mxu0 0.0
      %255 = vmatpush.msra.mxu0 0.0
      %256 = vmatpush.msra.mxu0 0.0
      %257 = vmatpush.msra.mxu0 0.0
      %258 = vmatpush.msra.mxu0 0.0
      %259 = vmatpush.msra.mxu0 0.0
      %260 = vmatpush.msra.mxu0 0.0
      %261 = vmatpush.msra.mxu0 0.0
      %262 = vmatpush.msra.mxu0 0.0
      %263 = vmatpush.msra.mxu0 0.0
      %264 = vmatpush.msra.mxu0 0.0
      %265 = vmatpush.msra.mxu0 0.0
      %266 = vmatpush.msra.mxu0 0.0
      %267 = vmatpush.msra.mxu0 %v231
      %268 = vmatpush.msra.mxu0 %v230
      %269 = vmatmul.f32.gmra.mxu0 %v248
      %v270 = vpop.f32.mrf.mxu0
      %v271 = vadd.f32 %v239, %v270
      %272 = vmatmul.f32.gmra.mxu0 %v251
      %v273 = vpop.f32.mrf.mxu0
      %v274 = vadd.f32 %v244, %v273
      %275 = vdwg.mxu0
      %v276 = vld [vmem:[%s1 + $0x20] sm:$0xff]
      %v277 = vsub.f32 %v271, %v188
      %v278 = vsub.f32 %v274, %v188
      %v279 = vmul.f32 %v277, %v229
      %v280 = vmul.f32 %v278, %v229
      %v281 = vld [vmem:[%s1 + $0x10] sm:$0xff]
      %v282 = vld [vmem:[%s1 + $0x18] sm:$0xff]
      %283 = vset.pattern.permute.xlu0 1
      %284 = vperm.xlu0 %283, %v234
      %v285 = vpop.permute.xlu0 %284
      %287 = vset.pattern.permute.xlu0 1
      %288 = vperm.xlu0 %287, %v235
      %v289 = vpop.permute.xlu0 %288
      %v292 = vsel %vm246, %v281, 0
      %v295 = vsel %vm246, %v282, 0
      %297 = vmatpush.msra.mxu0 0.0
      %298 = vmatpush.msra.mxu0 0.0
      %299 = vmatpush.msra.mxu0 0.0
      %300 = vmatpush.msra.mxu0 0.0
      %301 = vmatpush.msra.mxu0 0.0
      %302 = vmatpush.msra.mxu0 0.0
      %303 = vmatpush.msra.mxu0 0.0
      %304 = vmatpush.msra.mxu0 0.0
      %305 = vmatpush.msra.mxu0 0.0
      %306 = vmatpush.msra.mxu0 0.0
      %307 = vmatpush.msra.mxu0 0.0
      %308 = vmatpush.msra.mxu0 0.0
      %309 = vmatpush.msra.mxu0 0.0
      %310 = vmatpush.msra.mxu0 0.0
      %311 = vmatpush.msra.mxu0 %v280
      %312 = vmatpush.msra.mxu0 %v279
      %313 = vmatmul.f32.gmra.mxu0 %v292
      %v314 = vpop.f32.mrf.mxu0
      %v315 = vadd.f32 %v285, %v314
      %316 = vmatmul.f32.gmra.mxu0 %v295
      %v317 = vpop.f32.mrf.mxu0
      %v318 = vadd.f32 %v289, %v317
      %319 = vdwg.mxu0
      %v320 = vld [vmem:[%s1 + $0x28] sm:$0xff]
      %v322 = vsel %vm246, %v320, 0
      %324 = vmatpush.msra.mxu0 0.0
      %325 = vmatpush.msra.mxu0 0.0
      %326 = vmatpush.msra.mxu0 0.0
      %327 = vmatpush.msra.mxu0 0.0
      %328 = vmatpush.msra.mxu0 0.0
      %329 = vmatpush.msra.mxu0 0.0
      %330 = vmatpush.msra.mxu0 0.0
      %331 = vmatpush.msra.mxu0 0.0
      %332 = vmatpush.msra.mxu0 0.0
      %333 = vmatpush.msra.mxu0 0.0
      %334 = vmatpush.msra.mxu0 0.0
      %335 = vmatpush.msra.mxu0 0.0
      %336 = vmatpush.msra.mxu0 0.0
      %337 = vmatpush.msra.mxu0 0.0
      %338 = vmatpush.msra.mxu0 %v318
      %339 = vmatpush.msra.mxu0 %v315
      %340 = vmatmul.f32.gmra.mxu0 %v322
      %v341 = vpop.f32.mrf.mxu0
      %v342 = vadd.f32 0.0, %v341
      %343 = vdwg.mxu0
      %v345 = vsel %vm246, %v276, 0
      %347 = vmatpush.msra.mxu0 0.0
      %348 = vmatpush.msra.mxu0 0.0
      %349 = vmatpush.msra.mxu0 0.0
      %350 = vmatpush.msra.mxu0 0.0
      %351 = vmatpush.msra.mxu0 0.0
      %352 = vmatpush.msra.mxu0 0.0
      %353 = vmatpush.msra.mxu0 0.0
      %354 = vmatpush.msra.mxu0 0.0
      %355 = vmatpush.msra.mxu0 0.0
      %356 = vmatpush.msra.mxu0 0.0
      %357 = vmatpush.msra.mxu0 0.0
      %358 = vmatpush.msra.mxu0 0.0
      %359 = vmatpush.msra.mxu0 0.0
      %360 = vmatpush.msra.mxu0 0.0
      %361 = vmatpush.msra.mxu0 %v274
      %362 = vmatpush.msra.mxu0 %v271
      %363 = vmatmul.f32.gmra.mxu0 %v345
      %v364 = vpop.f32.mrf.mxu0
      %v365 = vadd.f32 %v342, %v364
      %366 = vdwg.mxu0
      %v367 = vld [vmem:[%s2] sm:$0xff]
      %369 = vset.pattern.permute.xlu0 2
      %370 = vperm.xlu0 %369, %v367
      %v371 = vpop.permute.xlu0 %370
      %v373 = vadd.f32 %v365, %v371
      %v374 = vmul.f32 %v373, %v215
      %v375 = vadd.f32 %v374, %v188
      %376 = vst.msk [vmem:[%s168] sm:$0xff] %vm171, %v375
      %p377 = scmp.lt.s32.totalorder %s14, 1
      %s378 = scalar_select %p377, %s14, 1
      %s379 = smul.addr %s378, 8
      %s380 = scalar_lea.vmem %s3, %s379
      // Predicated region
      $region33: #{hst_forward.1} parent=31 // pred_check
        %p381 = pneg %p100
      $region34: #{hst_forward.1} parent=31 // pred_check_branch
        %383 = sbr.rel (%p381) target = $region36
      $region35: #{hst_forward.1} parent=31 // pred_region
        _
      $region36: #{hst_forward.1} parent=31 // pred_fallthru
        _
    $region32: #{hst_forward.1} parent=5 // pred_fallthru
      _
    %p384 = scmp.le.s32.totalorder 2, %s9
    // Predicated region
    $region37: #{hst_forward.1} parent=5 // pred_check
      %p385 = pneg %p384
    $region38: #{hst_forward.1} parent=5 // pred_check_branch
      %387 = sbr.rel (%p385) target = $region40
    $region39: #{hst_forward.1} parent=5 // pred_region
      %s388 = ssub.s32 %s9, 2
      // Predicated region
      $region41: #{hst_forward.1} parent=39 // pred_check
        %p389 = pneg %p106
      $region42: #{hst_forward.1} parent=39 // pred_check_branch
        %391 = sbr.rel (%p389) target = $region44
      $region43: #{hst_forward.1} parent=39 // pred_region
        %p392 = scmp.lt.s32.totalorder %s15, 1
        %s393 = scalar_select %p392, %s15, 1
        %s394 = smul.addr %s393, 8
        %s395 = scalar_lea.vmem %s3, %s394
      $region44: #{hst_forward.1} parent=39 // pred_fallthru
        _
    $region40: #{hst_forward.1} parent=5 // pred_fallthru
      _
  $region6: #{hst_forward.1} parent=0 // loop_footer
    %s13 = sadd.s32 1, %s9
  $region7: #{hst_forward.1} parent=0 // loop_footer_branch
    %8 = sbr.rel target = $region3
  $region8: #{hst_forward.1} parent=0 // loop_exit
    _

</llo_original>
